<compile_context>
chip_gen: v7x
topology: tpu7x:2x2x1
jax: 0.10.0
libtpu: 0.0.40
codegen_flags: <defaults>
</compile_context>

<pallas_src>
import jax
import jax.numpy as jnp
from jax import lax
from jax.experimental import pallas as pl
from jax.experimental.pallas import tpu as pltpu


# ----------------------------------------------------------------------------
# Kernels
# ----------------------------------------------------------------------------

def _se_kernel_c_sublane(x_ref, w1_ref, w2t_ref, o_ref):
    """Layout A: x block (NB, C, HW) -- channels on sublanes, HW on lanes."""
    x = x_ref[...]                                            # (NB, C, HW)
    _, _, hw = x.shape

    # Squeeze: global average pool over HW, accumulated in f32.
    means = jnp.sum(x.astype(jnp.float32), axis=-1) * (1.0 / hw)   # (NB, C)

    # Excitation (batched over NB):  fc1 -> ReLU -> fc2 -> Sigmoid.
    # w1: (Cr, C) contracted on its last dim (lane-dense, trans_b matmul).
    y1 = lax.dot_general(means, w1_ref[...].astype(jnp.float32),
                         (((1,), (1,)), ((), ())),
                         preferred_element_type=jnp.float32)       # (NB, Cr)
    y1 = jnp.maximum(y1, 0.0)
    # w2 passed transposed as (Cr, C): plain lane-dense matmul.
    y2 = lax.dot_general(y1, w2t_ref[...].astype(jnp.float32),
                         (((1,), (0,)), ((), ())),
                         preferred_element_type=jnp.float32)       # (NB, C)
    scale = jax.nn.sigmoid(y2).astype(x.dtype)                     # (NB, C)

    # Scale: per-(image, channel) gate broadcast over HW, in the input dtype.
    o_ref[...] = (x * scale[:, :, None]).astype(o_ref.dtype)


def _se_kernel_c_lane(x_ref, w1_ref, w2t_ref, o_ref):
    """Layout B: x block (NB, HW, C) -- channels on lanes (for HW < 128)."""
    x = x_ref[...]                                            # (NB, HW, C)
    _, hw, _ = x.shape

    means = jnp.sum(x.astype(jnp.float32), axis=1) * (1.0 / hw)    # (NB, C)

    y1 = lax.dot_general(means, w1_ref[...].astype(jnp.float32),
                         (((1,), (1,)), ((), ())),
                         preferred_element_type=jnp.float32)       # (NB, Cr)
    y1 = jnp.maximum(y1, 0.0)
    y2 = lax.dot_general(y1, w2t_ref[...].astype(jnp.float32),
                         (((1,), (0,)), ((), ())),
                         preferred_element_type=jnp.float32)       # (NB, C)
    scale = jax.nn.sigmoid(y2).astype(x.dtype)                     # (NB, C)

    # Lane-dense store: gate broadcasts over the sublane (HW) axis.
    o_ref[...] = (x * scale[:, None, :]).astype(o_ref.dtype)


# ----------------------------------------------------------------------------
# Wrapper
# ----------------------------------------------------------------------------

def _pick_nb(batch, per_image_bytes, target_bytes=2 << 20):
    """Images per grid step: ~1-4 MiB blocks, NB | B, prefer >= 2 grid steps."""
    nb = int(max(1, min(batch, target_bytes // max(per_image_bytes, 1))))
    while batch % nb:
        nb -= 1
    if batch > 1 and batch // nb < 2:
        # Keep >= 2 parallel steps so both v7x TensorCores have work.
        nb = max(d for d in range(1, batch) if batch % d == 0 and batch // d >= 2)
    return nb


def se_layer(x, w1, w2):
    """SELayer forward.  x: (B, C, H, W) NCHW; w1: (C//r, C); w2: (C, C//r)."""
    B, C, H, W = x.shape
    HW = H * W
    Cr = w1.shape[0]
    w2t = w2.T                                     # (Cr, C), lane-dense weight

    itemsize = jnp.dtype(x.dtype).itemsize
    NB = _pick_nb(B, C * HW * itemsize)

    # Channels-on-lanes layout pays off when HW would force masked stores and
    # C is a clean multiple of 128 (the common SE placement in deep nets).
    use_c_lanes = (HW < 128) and (C % 128 == 0)

    cost = pl.CostEstimate(
        flops=2 * B * C * HW + 4 * B * C * Cr,
        transcendentals=B * C,
        bytes_accessed=2 * B * C * HW * itemsize
        + 2 * C * Cr * jnp.dtype(w1.dtype).itemsize,
    )
    cparams = pltpu.CompilerParams(
        dimension_semantics=("parallel",),
        # > v5e's 16 MiB default scope, still well inside v7x's 64 MiB VMEM.
        vmem_limit_bytes=48 << 20,
    )

    if use_c_lanes:
        # Layout plumbing: present a lane-dense (B, HW, C) slab to the kernel.
        x_in = x.reshape(B, C, HW).transpose(0, 2, 1)          # (B, HW, C)
        out = pl.pallas_call(
            _se_kernel_c_lane,
            out_shape=jax.ShapeDtypeStruct((B, HW, C), x.dtype),
            grid_spec=pltpu.PrefetchScalarGridSpec(
                num_scalar_prefetch=0,
                grid=(B // NB,),
                in_specs=[
                    pl.BlockSpec((NB, HW, C), lambda b: (b, 0, 0)),
                    pl.BlockSpec((Cr, C), lambda b: (0, 0)),
                    pl.BlockSpec((Cr, C), lambda b: (0, 0)),
                ],
                out_specs=pl.BlockSpec((NB, HW, C), lambda b: (b, 0, 0)),
            ),
            compiler_params=cparams,
            cost_estimate=cost,
        )(x_in, w1, w2t)
        return out.transpose(0, 2, 1).reshape(B, C, H, W)

    x_in = x.reshape(B, C, HW)                                 # (B, C, HW)
    out = pl.pallas_call(
        _se_kernel_c_sublane,
        out_shape=jax.ShapeDtypeStruct((B, C, HW), x.dtype),
        grid_spec=pltpu.PrefetchScalarGridSpec(
            num_scalar_prefetch=0,
            grid=(B // NB,),
            in_specs=[
                pl.BlockSpec((NB, C, HW), lambda b: (b, 0, 0)),
                pl.BlockSpec((Cr, C), lambda b: (0, 0)),
                pl.BlockSpec((Cr, C), lambda b: (0, 0)),
            ],
            out_specs=pl.BlockSpec((NB, C, HW), lambda b: (b, 0, 0)),
        ),
        compiler_params=cparams,
        cost_estimate=cost,
    )(x_in, w1, w2t)
    return out.reshape(B, C, H, W)


# ----------------------------------------------------------------------------
# Pure-JAX reference + test
# ----------------------------------------------------------------------------

def se_layer_ref(x, w1, w2):
    y = jnp.mean(x, axis=(2, 3))                 # (B, C)
    y = jnp.maximum(y @ w1.T, 0.0)               # (B, C//r)
    y = jax.nn.sigmoid(y @ w2.T)                 # (B, C)
    return x * y[:, :, None, None]


def _run_case(key, B, C, H, W, reduction):
    Cr = max(1, C // reduction)
    kx, k1, k2 = jax.random.split(key, 3)
    x = jax.random.normal(kx, (B, C, H, W), dtype=jnp.float32)
    # PyTorch Linear layout: (out_features, in_features), no bias.
    w1 = jax.random.normal(k1, (Cr, C), dtype=jnp.float32) * 0.1
    w2 = jax.random.normal(k2, (C, Cr), dtype=jnp.float32) * 0.1

    out = jax.block_until_ready(se_layer(x, w1, w2))
    ref = se_layer_ref(x, w1, w2)
    assert out.shape == (B, C, H, W)
    assert jnp.allclose(out, ref, atol=1e-5, rtol=1e-5), \
        f"mismatch vs reference for shape {(B, C, H, W)}"


if __name__ == "__main__":
    key = jax.random.PRNGKey(0)
    k_a, k_b = jax.random.split(key)

    # Case 1: HW (=256) lane-dense -> (NB, C, HW) layout, NB=2 images/step.
    _run_case(k_a, B=4, C=32, H=16, W=16, reduction=16)

    # Case 2: HW=49 < 128, C=128 -> channels-on-lanes (NB, HW, C) layout.
    _run_case(k_b, B=2, C=128, H=7, W=7, reduction=16)

    print("KERNEL_OK")
</pallas_src>

<mosaic_0001>
module attributes {stable_mosaic.version = 11 : i64} {
  func.func @_se_kernel_c_sublane(%arg0: i32, %arg1: memref<2x32x256xf32, #tpu.memory_space<vmem>>, %arg2: memref<2x32xf32, #tpu.memory_space<vmem>>, %arg3: memref<2x32xf32, #tpu.memory_space<vmem>>, %arg4: memref<2x32x256xf32, #tpu.memory_space<vmem>>) attributes {dimension_semantics = [#tpu.dimension_semantics<parallel>], iteration_bounds = array<i64: 2>, scalar_prefetch = 0 : i64, scratch_operands = 0 : i64, tpu.core_type = #tpu.core_type<tc>, window_params = [{transform_indices = @transform_0, window_bounds = array<i64: 2, 32, 256>}, {pipeline_mode = #tpu.pipeline_mode<synchronous>, transform_indices = @transform_1, window_bounds = array<i64: 2, 32>}, {pipeline_mode = #tpu.pipeline_mode<synchronous>, transform_indices = @transform_2, window_bounds = array<i64: 2, 32>}, {transform_indices = @transform_3, window_bounds = array<i64: 2, 32, 256>}]} {
    %c0 = arith.constant 0 : index
    %c0_0 = arith.constant 0 : index
    %c0_1 = arith.constant 0 : index
    %0 = vector.load %arg1[%c0, %c0_0, %c0_1] : memref<2x32x256xf32, #tpu.memory_space<vmem>>, vector<2x32x256xf32>
    %cst = arith.constant dense<0.000000e+00> : vector<2x32xf32>
    %1 = vector.multi_reduction <add>, %0, %cst [2] : vector<2x32x256xf32> to vector<2x32xf32>
    %cst_2 = arith.constant 3.906250e-03 : f32
    %2 = vector.broadcast %cst_2 : f32 to vector<2x32xf32>
    %3 = arith.mulf %1, %2 : vector<2x32xf32>
    %c0_3 = arith.constant 0 : index
    %c0_4 = arith.constant 0 : index
    %4 = vector.load %arg2[%c0_3, %c0_4] : memref<2x32xf32, #tpu.memory_space<vmem>>, vector<2x32xf32>
    %cst_5 = arith.constant dense<0.000000e+00> : vector<2x2xf32>
    %5 = tpu.matmul %3, %4, %cst_5 {dimension_numbers = #tpu.dot_dimension_numbers<[1], [1], [0], [0], [0, 0, 1, 0], [], []>} : vector<2x32xf32>, vector<2x32xf32>, vector<2x2xf32> -> vector<2x2xf32>
    %cst_6 = arith.constant 0.000000e+00 : f32
    %6 = vector.broadcast %cst_6 : f32 to vector<2x2xf32>
    %7 = arith.maximumf %5, %6 : vector<2x2xf32>
    %c0_7 = arith.constant 0 : index
    %c0_8 = arith.constant 0 : index
    %8 = vector.load %arg3[%c0_7, %c0_8] : memref<2x32xf32, #tpu.memory_space<vmem>>, vector<2x32xf32>
    %cst_9 = arith.constant dense<0.000000e+00> : vector<2x32xf32>
    %9 = tpu.matmul %7, %8, %cst_9 {dimension_numbers = #tpu.dot_dimension_numbers<[1], [0], [0], [1], [0, 0, 1, 1], [], []>} : vector<2x2xf32>, vector<2x32xf32>, vector<2x32xf32> -> vector<2x32xf32>
    %10 = arith.negf %9 : vector<2x32xf32>
    %11 = math.exp %10 : vector<2x32xf32>
    %cst_10 = arith.constant 1.000000e+00 : f32
    %12 = vector.broadcast %cst_10 : f32 to vector<2x32xf32>
    %13 = arith.addf %12, %11 : vector<2x32xf32>
    %14 = arith.divf %12, %13 : vector<2x32xf32>
    %15 = vector.shape_cast %14 : vector<2x32xf32> to vector<2x32x1xf32>
    %16 = vector.broadcast %15 : vector<2x32x1xf32> to vector<2x32x256xf32>
    %17 = arith.mulf %0, %16 : vector<2x32x256xf32>
    %c0_11 = arith.constant 0 : index
    %c0_12 = arith.constant 0 : index
    %c0_13 = arith.constant 0 : index
    %18 = vector.load %arg4[%c0_11, %c0_12, %c0_13] : memref<2x32x256xf32, #tpu.memory_space<vmem>>, vector<2x32x256xf32>
    tpu.vector_store %arg4[%c0_11, %c0_12, %c0_13], %17 {strides = array<i32>} : memref<2x32x256xf32, #tpu.memory_space<vmem>>, vector<2x32x256xf32>,
    return
  }
  func.func @transform_0(%arg0: i32) -> (i32, i32, i32) {
    %c0_i32 = arith.constant 0 : i32
    %c0_i32_0 = arith.constant 0 : i32
    %c0_i32_1 = arith.constant 0 : i32
    return %arg0, %c0_i32, %c0_i32_0 : i32, i32, i32
  }
  func.func @transform_1(%arg0: i32) -> (i32, i32) {
    %c0_i32 = arith.constant 0 : i32
    %c0_i32_0 = arith.constant 0 : i32
    %c0_i32_1 = arith.constant 0 : i32
    return %c0_i32, %c0_i32_0 : i32, i32
  }
  func.func @transform_2(%arg0: i32) -> (i32, i32) {
    %c0_i32 = arith.constant 0 : i32
    %c0_i32_0 = arith.constant 0 : i32
    %c0_i32_1 = arith.constant 0 : i32
    return %c0_i32, %c0_i32_0 : i32, i32
  }
  func.func @transform_3(%arg0: i32) -> (i32, i32, i32) {
    %c0_i32 = arith.constant 0 : i32
    %c0_i32_0 = arith.constant 0 : i32
    %c0_i32_1 = arith.constant 0 : i32
    return %arg0, %c0_i32, %c0_i32_0 : i32, i32, i32
  }
}

</mosaic_0001>

<llo_original>
// kernel: tpu_custom_call.1
$region0: #{tpu_custom_call.1}
  #allocation0 [shape = 'u32[]', space=smem, size = 0x4, offset = 0x4, fixed_abs, tag = 'smem constant byte address 0x4 - core index']
  #allocation1 [shape = 'u32[144,128]{1,0:T(1,128)}', space=vmem, size = 0x12000, scoped, tag = 'internal scratch']
  %s0 = inlined_call_operand.hbm [shape: f32[4,32,256], index: 0, kind: input, shape index: {}]
  %s1 = inlined_call_operand.vmem [shape: f32[2,32], index: 1, kind: input, shape index: {}]
  %s2 = inlined_call_operand.vmem [shape: f32[2,32], index: 2, kind: input, shape index: {}]
  %s3 = inlined_call_operand.hbm [shape: f32[4,32,256], index: 3, kind: output, shape index: {}]
  %s4 = sld [smem:[#allocation0]]
  $region49: #{tpu_custom_call.1} parent=0
    _
  %s6 = ssub.s32 1, %s4
  %s7 = scalar_select 0, %s6, %s4
  $region1: #{tpu_custom_call.1} parent=0
    #allocation2 [shape = 'u8[131072]{0}', space=vmem, size = 0x20000, scoped, tag = 'input window, operand 0']
    #allocation3 [shape = 's32[2]{0}', space=sflag, size = 0x8, scoped, tag = 'scoped memory for tpu_custom_call.1']
    #allocation4 [shape = 's32[2]{0}', space=sflag, size = 0x8, scoped, tag = 'scoped memory for tpu_custom_call.1']
    #allocation5 [shape = 'u8[131072]{0}', space=vmem, size = 0x20000, scoped, tag = 'output window, operand 0']
    %8 = vsyncpa [#allocation3], 0
    %s9 = scalar_lea.sflag [#allocation3], 1
    %10 = vsyncpa %s9, 0
    %11 = vsyncpa [#allocation4], 0
    %s12 = scalar_lea.sflag [#allocation4], 1
    %13 = vsyncpa %s12, 0
    loop: start=0, step=1, limit=4
    $region2: #{tpu_custom_call.1} parent=1 // loop_pre_header
      _
    $region3: #{tpu_custom_call.1} parent=1 // loop_header
      %s15 = sphi 0, %s19
      %p16 = scmp.ge.s32.totalorder %s15, 4
      %s25 = sphi 0, %s27
      %s28 = sphi 0, %s25
      %s29 = sphi 0, %s28
      %s45 = sphi 0, %s29
      %s49 = sphi 0, %s49
      %s51 = sphi 0, %s49
      %s52 = sphi 0, %s51
      %s66 = sphi 0, %s52
      %s70 = sphi 0, %s70
      %s72 = sphi 0, %s70
      %s73 = sphi 0, %s72
      %s87 = sphi 0, %s73
      %s93 = sphi 0, %s95
      %s96 = sphi 0, %s93
      %s97 = sphi 0, %s96
      %s113 = sphi 0, %s97
    $region4: #{tpu_custom_call.1} parent=1 // loop_header_branch
      %18 = sbr.rel (%p16) target = $region8
    $region5: #{tpu_custom_call.1} parent=1 // loop_body
      %s20 = ssub.s32 %s15, 1
      %s21 = ssub.s32 %s15, 2
      %s22 = sadd.s32 %s15, 1
      %s23 = ssub.s32 %s15, %s22
      %p24 = scmp.eq.s32.totalorder %s23, 0
      %s26 = sadd.s32 %s25, 1
      %s27 = scalar_select %p24, %s25, %s26
      %p30 = pneg %p24
      %p31 = scmp.eq.s32.totalorder %s15, 1
      %p32 = por %p30, %p31
      %p33 = scmp.ne.s32.totalorder %s25, %s28
      %p34 = scmp.eq.s32.totalorder %s15, 0
      %p35 = por %p33, %p34
      %p36 = scmp.ne.s32.totalorder %s25, %s28
      %p37 = scmp.eq.s32.totalorder %s20, 1
      %p38 = por %p36, %p37
      %p39 = scmp.ne.s32.totalorder %s28, %s29
      %p40 = scmp.eq.s32.totalorder %s20, 0
      %p41 = por %p39, %p40
      %p42 = scmp.ne.s32.totalorder %s28, %s29
      %p43 = scmp.eq.s32.totalorder %s21, 1
      %p44 = por %p42, %p43
      %p46 = scmp.ne.s32.totalorder %s29, %s45
      %p47 = scmp.eq.s32.totalorder %s21, 0
      %p48 = por %p46, %p47
      %s50 = sadd.s32 %s49, 1
      %p53 = scmp.eq.s32.totalorder %s15, 1
      %p54 = scmp.ne.s32.totalorder %s49, %s51
      %p55 = scmp.eq.s32.totalorder %s15, 0
      %p56 = por %p54, %p55
      %p57 = scmp.ne.s32.totalorder %s49, %s51
      %p58 = scmp.eq.s32.totalorder %s20, 1
      %p59 = por %p57, %p58
      %p60 = scmp.ne.s32.totalorder %s51, %s52
      %p61 = scmp.eq.s32.totalorder %s20, 0
      %p62 = por %p60, %p61
      %p63 = scmp.ne.s32.totalorder %s51, %s52
      %p64 = scmp.eq.s32.totalorder %s21, 1
      %p65 = por %p63, %p64
      %p67 = scmp.ne.s32.totalorder %s52, %s66
      %p68 = scmp.eq.s32.totalorder %s21, 0
      %p69 = por %p67, %p68
      %s71 = sadd.s32 %s70, 1
      %p74 = scmp.eq.s32.totalorder %s15, 1
      %p75 = scmp.ne.s32.totalorder %s70, %s72
      %p76 = scmp.eq.s32.totalorder %s15, 0
      %p77 = por %p75, %p76
      %p78 = scmp.ne.s32.totalorder %s70, %s72
      %p79 = scmp.eq.s32.totalorder %s20, 1
      %p80 = por %p78, %p79
      %p81 = scmp.ne.s32.totalorder %s72, %s73
      %p82 = scmp.eq.s32.totalorder %s20, 0
      %p83 = por %p81, %p82
      %p84 = scmp.ne.s32.totalorder %s72, %s73
      %p85 = scmp.eq.s32.totalorder %s21, 1
      %p86 = por %p84, %p85
      %p88 = scmp.ne.s32.totalorder %s73, %s87
      %p89 = scmp.eq.s32.totalorder %s21, 0
      %p90 = por %p88, %p89
      %s91 = ssub.s32 %s15, %s22
      %p92 = scmp.eq.s32.totalorder %s91, 0
      %s94 = sadd.s32 %s93, 1
      %s95 = scalar_select %p92, %s93, %s94
      %p98 = pneg %p92
      %p99 = scmp.eq.s32.totalorder %s15, 1
      %p100 = por %p98, %p99
      %p101 = scmp.ne.s32.totalorder %s93, %s96
      %p102 = scmp.eq.s32.totalorder %s15, 0
      %p103 = por %p101, %p102
      %p104 = scmp.ne.s32.totalorder %s93, %s96
      %p105 = scmp.eq.s32.totalorder %s20, 1
      %p106 = por %p104, %p105
      %p107 = scmp.ne.s32.totalorder %s96, %s97
      %p108 = scmp.eq.s32.totalorder %s20, 0
      %p109 = por %p107, %p108
      %p110 = scmp.ne.s32.totalorder %s96, %s97
      %p111 = scmp.eq.s32.totalorder %s21, 1
      %p112 = por %p110, %p111
      %p114 = scmp.ne.s32.totalorder %s97, %s113
      %p115 = scmp.eq.s32.totalorder %s21, 0
      %p116 = por %p114, %p115
      %p117 = scmp.le.s32.totalorder 1, %s15
      %p118 = scmp.lt.s32.totalorder %s15, 3
      %p119 = pnand %p117, %p118
      %p120 = pneg %p119
      // Predicated region
      $region9: #{tpu_custom_call.1} parent=5 // pred_check
        _
      $region10: #{tpu_custom_call.1} parent=5 // pred_check_branch
        %122 = sbr.rel (%p119) target = $region12
      $region11: #{tpu_custom_call.1} parent=5 // pred_region
        %s123 = ssub.s32 %s15, 1
        // Predicated region
        $region13: #{tpu_custom_call.1} parent=11 // pred_check
          %p124 = pneg %p62
        $region14: #{tpu_custom_call.1} parent=11 // pred_check_branch
          %126 = sbr.rel (%p124) target = $region16
        $region15: #{tpu_custom_call.1} parent=11 // pred_region
          _
        $region16: #{tpu_custom_call.1} parent=11 // pred_fallthru
          _
        // Predicated region
        $region17: #{tpu_custom_call.1} parent=11 // pred_check
          %p127 = pneg %p83
        $region18: #{tpu_custom_call.1} parent=11 // pred_check_branch
          %129 = sbr.rel (%p127) target = $region20
        $region19: #{tpu_custom_call.1} parent=11 // pred_region
          _
        $region20: #{tpu_custom_call.1} parent=11 // pred_fallthru
          _
      $region12: #{tpu_custom_call.1} parent=5 // pred_fallthru
        _
      %p130 = scmp.lt.s32.totalorder %s15, 2
      // Predicated region
      $region21: #{tpu_custom_call.1} parent=5 // pred_check
        %p131 = pneg %p130
      $region22: #{tpu_custom_call.1} parent=5 // pred_check_branch
        %133 = sbr.rel (%p131) target = $region24
      $region23: #{tpu_custom_call.1} parent=5 // pred_region
        // Predicated region
        $region25: #{tpu_custom_call.1} parent=23 // pred_check
          %p134 = pneg %p35
        $region26: #{tpu_custom_call.1} parent=23 // pred_check_branch
          %136 = sbr.rel (%p134) target = $region28
        $region27: #{tpu_custom_call.1} parent=23 // pred_region
          %s137 = sand.u32 %s25, 1
          %s138 = scalar_lea.sflag [#allocation3], %s137
          %s139 = sand.u32 %s25, 1
          %s140 = smul.addr %s139, 128
          %s141 = scalar_lea.vmem [#allocation2], %s140
          %s142 = smul.u32 2, %s15
          %s144 = ssub.s32 2048, 2048
          %145 = vsyncadd %s138, %s144
          %s146 = smul.addr %s142, 8
          %s147 = smul.addr %s146, 128
          %s148 = scalar_lea.hbm %s0, %s147
          %s149 = sshll.u32 %s141, 4
          %s150 = int_to_ptr.vmem [resolvable:$true] %s149
          %155 = dma.hbm_to_vmem [thread:$0]  %s148, 2048, %s150, %s138, 256, 256, 16
        $region28: #{tpu_custom_call.1} parent=23 // pred_fallthru
          _
      $region24: #{tpu_custom_call.1} parent=5 // pred_fallthru
        _
      %p156 = scmp.le.s32.totalorder 1, %s15
      %p157 = scmp.lt.s32.totalorder %s15, 3
      %p158 = pnand %p156, %p157
      %p159 = pneg %p158
      // Predicated region
      $region29: #{tpu_custom_call.1} parent=5 // pred_check
        _
      $region30: #{tpu_custom_call.1} parent=5 // pred_check_branch
        %161 = sbr.rel (%p158) target = $region32
      $region31: #{tpu_custom_call.1} parent=5 // pred_region
        %s162 = ssub.s32 %s15, 1
        %s163 = sand.u32 %s28, 1
        %s164 = scalar_lea.sflag [#allocation3], %s163
        %s165 = sand.u32 %s28, 1
        %s166 = smul.addr %s165, 128
        %s167 = scalar_lea.vmem [#allocation2], %s166
        // Predicated region
        $region33: #{tpu_custom_call.1} parent=31 // pred_check
          %p168 = pneg %p41
        $region34: #{tpu_custom_call.1} parent=31 // pred_check_branch
          %170 = sbr.rel (%p168) target = $region36
        $region35: #{tpu_custom_call.1} parent=31 // pred_region
          %171 = dma.done %s164, 2048
        $region36: #{tpu_custom_call.1} parent=31 // pred_fallthru
          _
        %s172 = sand.u32 %s28, 1
        %s173 = scalar_lea.sflag [#allocation3], %s172
        %s174 = sand.u32 %s28, 1
        %s175 = smul.addr %s174, 128
        %s176 = scalar_lea.vmem [#allocation2], %s175
        %p177 = pneg %p41
        %p178 = pneg %p38
        %p179 = pneg %p62
        %p180 = pneg %p59
        %p181 = pneg %p83
        %p182 = pneg %p80
        %p183 = pneg %p109
        %p184 = pneg %p106
        %s185 = sand.u32 %s96, 1
        %s186 = scalar_lea.sflag [#allocation4], %s185
        %s187 = sand.u32 %s96, 1
        %s188 = smul.addr %s187, 128
        %s189 = scalar_lea.vmem [#allocation5], %s188
        %s190 = smul.u32 2, %s20
        %s191 = smul.u32 2, %s20
        %v192 = vld [vmem:[%s167] sm:$0xff]
        %v193 = vld [vmem:[%s167 + $0x8] sm:$0xff]
        %v194 = vld [vmem:[%s167 + $0x10] sm:$0xff]
        %v195 = vld [vmem:[%s167 + $0x18] sm:$0xff]
        %v196 = vld [vmem:[%s167 + $0x20] sm:$0xff]
        %v197 = vld [vmem:[%s167 + $0x28] sm:$0xff]
        %v198 = vld [vmem:[%s167 + $0x30] sm:$0xff]
        %v199 = vld [vmem:[%s167 + $0x38] sm:$0xff]
        %v200 = vld [vmem:[%s167 + $0x40] sm:$0xff]
        %v201 = vld [vmem:[%s167 + $0x48] sm:$0xff]
        %v202 = vld [vmem:[%s167 + $0x50] sm:$0xff]
        %v203 = vld [vmem:[%s167 + $0x58] sm:$0xff]
        %v204 = vld [vmem:[%s167 + $0x60] sm:$0xff]
        %v205 = vld [vmem:[%s167 + $0x68] sm:$0xff]
        %v206 = vld [vmem:[%s167 + $0x70] sm:$0xff]
        %v207 = vld [vmem:[%s167 + $0x78] sm:$0xff]
        %v208 = vadd.f32 %v192, %v193
        %209 = vadd.xlane.f32.xlu0 %v208
        %v210 = vpop.xlane.xlu0 %209
        %v211 = vadd.f32 %v194, %v195
        %212 = vadd.xlane.f32.xlu0 %v211
        %v213 = vpop.xlane.xlu0 %212
        %v214 = vadd.f32 %v196, %v197
        %215 = vadd.xlane.f32.xlu0 %v214
        %v216 = vpop.xlane.xlu0 %215
        %v217 = vadd.f32 %v198, %v199
        %218 = vadd.xlane.f32.xlu0 %v217
        %v219 = vpop.xlane.xlu0 %218
        %v220 = vadd.f32 %v200, %v201
        %221 = vadd.xlane.f32.xlu0 %v220
        %v222 = vpop.xlane.xlu0 %221
        %v223 = vadd.f32 %v202, %v203
        %224 = vadd.xlane.f32.xlu0 %v223
        %v225 = vpop.xlane.xlu0 %224
        %v226 = vadd.f32 %v204, %v205
        %227 = vadd.xlane.f32.xlu0 %v226
        %v228 = vpop.xlane.xlu0 %227
        %v229 = vadd.f32 %v206, %v207
        %230 = vadd.xlane.f32.xlu0 %v229
        %v231 = vpop.xlane.xlu0 %230
        %v232 = vmul.f32 %v210, 0.00390625
        %v233 = vmul.f32 %v213, 0.00390625
        %v234 = vmul.f32 %v216, 0.00390625
        %v235 = vmul.f32 %v219, 0.00390625
        %v236 = vmul.f32 %v222, 0.00390625
        %v237 = vmul.f32 %v225, 0.00390625
        %v238 = vmul.f32 %v228, 0.00390625
        %v239 = vmul.f32 %v231, 0.00390625
        %v240 = vld [vmem:[%s1] sm:$0x3]
        %v249 = vlaneseq
        %v250 = vand.u32 %v249, 127
        %v251 = vlaneseq
        %v252 = vshrl.u32 %v251, 7
        %v253 = vsub.s32 %v250, %v252
        %v254 = vrot.slane %v232, %v253
        %v255 = vadd.s32 %v250, 4294967288
        %v256 = vlaneseq
        %v257 = vshrl.u32 %v256, 7
        %v258 = vsub.s32 %v255, %v257
        %v259 = vrot.slane %v233, %v258
        %vm260 = vcmask 130112
        %v261 = vsel %vm260, %v259, %v254
        %v262 = vadd.s32 %v250, 4294967280
        %v263 = vlaneseq
        %v264 = vshrl.u32 %v263, 7
        %v265 = vsub.s32 %v262, %v264
        %v266 = vrot.slane %v234, %v265
        %vm267 = vcmask 195712
        %v268 = vsel %vm267, %v266, %v261
        %v269 = vadd.s32 %v250, 4294967272
        %v270 = vlaneseq
        %v271 = vshrl.u32 %v270, 7
        %v272 = vsub.s32 %v269, %v271
        %v273 = vrot.slane %v235, %v272
        %vm274 = vcmask 261312
        %v275 = vsel %vm274, %v273, %v268
        %v276 = vlaneseq
        %v277 = vshrl.u32 %v276, 7
        %v278 = vsub.s32 %v250, %v277
        %v279 = vrot.slane %v236, %v278
        %v280 = vlaneseq
        %v281 = vshrl.u32 %v280, 7
        %v282 = vsub.s32 %v255, %v281
        %v283 = vrot.slane %v237, %v282
        %v284 = vsel %vm260, %v283, %v279
        %v285 = vlaneseq
        %v286 = vshrl.u32 %v285, 7
        %v287 = vsub.s32 %v262, %v286
        %v288 = vrot.slane %v238, %v287
        %v289 = vsel %vm267, %v288, %v284
        %v290 = vlaneseq
        %v291 = vshrl.u32 %v290, 7
        %v292 = vsub.s32 %v269, %v291
        %v293 = vrot.slane %v239, %v292
        %v294 = vsel %vm274, %v293, %v289
        %vm295 = vcmask 1041409
        %v296 = vsel %vm295, %v294, %v275
        %vm297 = vcmask 261120
        %v298 = vsel %vm297, %v296, 0
        %v301 = vsel %vm297, %v240, 0
        %303 = vmatprep.subr.mxu0 0.0
        %304 = vmatpush1.xpose.msra.mxu0 %v301
        %305 = vmatprep.subr.mxu0 0.0
        %306 = vmatpush1.xpose.msra.mxu0 0.0
        %307 = vmatprep.subr.mxu0 0.0
        %308 = vmatpush1.xpose.msra.mxu0 0.0
        %309 = vmatprep.subr.mxu0 0.0
        %310 = vmatpush1.xpose.msra.mxu0 0.0
        %311 = vmatprep.subr.mxu0 0.0
        %312 = vmatpush1.xpose.msra.mxu0 0.0
        %313 = vmatprep.subr.mxu0 0.0
        %314 = vmatpush1.xpose.msra.mxu0 0.0
        %315 = vmatprep.subr.mxu0 0.0
        %316 = vmatpush1.xpose.msra.mxu0 0.0
        %317 = vmatprep.subr.mxu0 0.0
        %318 = vmatpush1.xpose.msra.mxu0 0.0
        %319 = vmatprep.subr.mxu0 0.0
        %320 = vmatpush1.xpose.msra.mxu0 0.0
        %321 = vmatprep.subr.mxu0 0.0
        %322 = vmatpush1.xpose.msra.mxu0 0.0
        %323 = vmatprep.subr.mxu0 0.0
        %324 = vmatpush1.xpose.msra.mxu0 0.0
        %325 = vmatprep.subr.mxu0 0.0
        %326 = vmatpush1.xpose.msra.mxu0 0.0
        %327 = vmatprep.subr.mxu0 0.0
        %328 = vmatpush1.xpose.msra.mxu0 0.0
        %329 = vmatprep.subr.mxu0 0.0
        %330 = vmatpush1.xpose.msra.mxu0 0.0
        %331 = vmatprep.subr.mxu0 0.0
        %332 = vmatpush1.xpose.msra.mxu0 0.0
        %333 = vmatprep.subr.mxu0 0.0
        %334 = vmatpush1.xpose.msra.mxu0 0.0
        %335 = vmatprep.subr.mxu0 0.0
        %336 = vmatpush1.xpose.msra.mxu0 0.0
        %337 = vmatprep.subr.mxu0 0.0
        %338 = vmatpush1.xpose.msra.mxu0 0.0
        %339 = vmatprep.subr.mxu0 0.0
        %340 = vmatpush1.xpose.msra.mxu0 0.0
        %341 = vmatprep.subr.mxu0 0.0
        %342 = vmatpush1.xpose.msra.mxu0 0.0
        %343 = vmatprep.subr.mxu0 0.0
        %344 = vmatpush1.xpose.msra.mxu0 0.0
        %345 = vmatprep.subr.mxu0 0.0
        %346 = vmatpush1.xpose.msra.mxu0 0.0
        %347 = vmatprep.subr.mxu0 0.0
        %348 = vmatpush1.xpose.msra.mxu0 0.0
        %349 = vmatprep.subr.mxu0 0.0
        %350 = vmatpush1.xpose.msra.mxu0 0.0
        %351 = vmatprep.subr.mxu0 0.0
        %352 = vmatpush1.xpose.msra.mxu0 0.0
        %353 = vmatprep.subr.mxu0 0.0
        %354 = vmatpush1.xpose.msra.mxu0 0.0
        %355 = vmatprep.subr.mxu0 0.0
        %356 = vmatpush1.xpose.msra.mxu0 0.0
        %357 = vmatprep.subr.mxu0 0.0
        %358 = vmatpush1.xpose.msra.mxu0 0.0
        %359 = vmatprep.subr.mxu0 0.0
        %360 = vmatpush1.xpose.msra.mxu0 0.0
        %361 = vmatprep.subr.mxu0 0.0
        %362 = vmatpush1.xpose.msra.mxu0 0.0
        %363 = vmatprep.subr.mxu0 0.0
        %364 = vmatpush1.xpose.msra.mxu0 0.0
        %365 = vmatprep.subr.mxu0 0.0
        %366 = vmatpush1.xpose.msra.mxu0 0.0
        %367 = vmatprep.mubr.f32.mxu0 0.0
        %368 = vmatmul.mubr.f32.gmra.mrb[0].mxu0 %v298
        %v369 = vpop.f32.mrb[0].mxu0
        %v370 = vadd.f32 0.0, %v369
        %v371 = vpop.f32.mrb[0].mxu0
        %372 = vdwg.mxu0
        %v373 = vmax.f32 %v370, 0.0
        %v374 = vld [vmem:[%s2] sm:$0x3]
        %vm375 = vcmask 15360
        %v377 = vsel %vm375, %v373, 0
        %vm379 = vcmask 1041408
        %v381 = vsel %vm379, %v374, 0
        %383 = vmatprep.subr.mxu0 0.0
        %384 = vmatpush1.msra.mxu0 %v381
        %385 = vmatprep.subr.mxu0 0.0
        %386 = vmatpush1.msra.mxu0 0.0
        %387 = vmatprep.subr.mxu0 0.0
        %388 = vmatpush1.msra.mxu0 0.0
        %389 = vmatprep.subr.mxu0 0.0
        %390 = vmatpush1.msra.mxu0 0.0
        %391 = vmatprep.subr.mxu0 0.0
        %392 = vmatpush1.msra.mxu0 0.0
        %393 = vmatprep.subr.mxu0 0.0
        %394 = vmatpush1.msra.mxu0 0.0
        %395 = vmatprep.subr.mxu0 0.0
        %396 = vmatpush1.msra.mxu0 0.0
        %397 = vmatprep.subr.mxu0 0.0
        %398 = vmatpush1.msra.mxu0 0.0
        %399 = vmatprep.subr.mxu0 0.0
        %400 = vmatpush1.msra.mxu0 0.0
        %401 = vmatprep.subr.mxu0 0.0
        %402 = vmatpush1.msra.mxu0 0.0
        %403 = vmatprep.subr.mxu0 0.0
        %404 = vmatpush1.msra.mxu0 0.0
        %405 = vmatprep.subr.mxu0 0.0
        %406 = vmatpush1.msra.mxu0 0.0
        %407 = vmatprep.subr.mxu0 0.0
        %408 = vmatpush1.msra.mxu0 0.0
        %409 = vmatprep.subr.mxu0 0.0
        %410 = vmatpush1.msra.mxu0 0.0
        %411 = vmatprep.subr.mxu0 0.0
        %412 = vmatpush1.msra.mxu0 0.0
        %413 = vmatprep.subr.mxu0 0.0
        %414 = vmatpush1.msra.mxu0 0.0
        %415 = vmatprep.subr.mxu0 0.0
        %416 = vmatpush1.msra.mxu0 0.0
        %417 = vmatprep.subr.mxu0 0.0
        %418 = vmatpush1.msra.mxu0 0.0
        %419 = vmatprep.subr.mxu0 0.0
        %420 = vmatpush1.msra.mxu0 0.0
        %421 = vmatprep.subr.mxu0 0.0
        %422 = vmatpush1.msra.mxu0 0.0
        %423 = vmatprep.subr.mxu0 0.0
        %424 = vmatpush1.msra.mxu0 0.0
        %425 = vmatprep.subr.mxu0 0.0
        %426 = vmatpush1.msra.mxu0 0.0
        %427 = vmatprep.subr.mxu0 0.0
        %428 = vmatpush1.msra.mxu0 0.0
        %429 = vmatprep.subr.mxu0 0.0
        %430 = vmatpush1.msra.mxu0 0.0
        %431 = vmatprep.subr.mxu0 0.0
        %432 = vmatpush1.msra.mxu0 0.0
        %433 = vmatprep.subr.mxu0 0.0
        %434 = vmatpush1.msra.mxu0 0.0
        %435 = vmatprep.subr.mxu0 0.0
        %436 = vmatpush1.msra.mxu0 0.0
        %437 = vmatprep.subr.mxu0 0.0
        %438 = vmatpush1.msra.mxu0 0.0
        %439 = vmatprep.subr.mxu0 0.0
        %440 = vmatpush1.msra.mxu0 0.0
        %441 = vmatprep.subr.mxu0 0.0
        %442 = vmatpush1.msra.mxu0 0.0
        %443 = vmatprep.subr.mxu0 0.0
        %444 = vmatpush1.msra.mxu0 0.0
        %445 = vmatprep.subr.mxu0 0.0
        %446 = vmatpush1.msra.mxu0 0.0
        %447 = vmatprep.mubr.f32.mxu0 0.0
        %448 = vmatmul.mubr.f32.gmra.mrb[0].mxu0 %v377
        %v449 = vpop.f32.mrb[0].mxu0
        %v450 = vadd.f32 0.0, %v449
        %v451 = vpop.f32.mrb[0].mxu0
        %452 = vdwg.mxu0
        %v453 = vxor.u32 %v450, 2147483648
        %v454 = vmul.f32 %v453, 1.442695
        %v455 = vpow.pop %v454
        %v456 = vadd.f32 %v455, 1.0
        %v457 = vrcp.pop %v456
        %v458 = vmul.f32 1.0, %v457
        %v459 = vlaneseq
        %v460 = vshrl.u32 %v459, 7
        %v461 = vsub.s32 0, %v460
        %v462 = vrot.slane %v458, %v461
        %464 = vbcast.lane.b32.xlu0 %v462, 256
        %v465 = vpop.permute.xlu0 %464
        %s467 = sor.u32 256, 8
        %468 = vbcast.lane.b32.xlu0 %v462, %s467
        %v469 = vpop.permute.xlu0 %468
        %s471 = sor.u32 256, 16
        %472 = vbcast.lane.b32.xlu0 %v462, %s471
        %v473 = vpop.permute.xlu0 %472
        %s475 = sor.u32 256, 24
        %476 = vbcast.lane.b32.xlu0 %v462, %s475
        %v477 = vpop.permute.xlu0 %476
        %v478 = vlaneseq
        %v479 = vshrl.u32 %v478, 7
        %v480 = vsub.s32 1, %v479
        %v481 = vrot.slane %v458, %v480
        %483 = vbcast.lane.b32.xlu0 %v481, 256
        %v484 = vpop.permute.xlu0 %483
        %s486 = sor.u32 256, 8
        %487 = vbcast.lane.b32.xlu0 %v481, %s486
        %v488 = vpop.permute.xlu0 %487
        %s490 = sor.u32 256, 16
        %491 = vbcast.lane.b32.xlu0 %v481, %s490
        %v492 = vpop.permute.xlu0 %491
        %s494 = sor.u32 256, 24
        %495 = vbcast.lane.b32.xlu0 %v481, %s494
        %v496 = vpop.permute.xlu0 %495
        %v497 = vmul.f32 %v192, %v465
        %v498 = vmul.f32 %v193, %v465
        %v499 = vmul.f32 %v194, %v469
        %v500 = vmul.f32 %v195, %v469
        %v501 = vmul.f32 %v196, %v473
        %v502 = vmul.f32 %v197, %v473
        %v503 = vmul.f32 %v198, %v477
        %v504 = vmul.f32 %v199, %v477
        %v505 = vmul.f32 %v200, %v484
        %v506 = vmul.f32 %v201, %v484
        %v507 = vmul.f32 %v202, %v488
        %v508 = vmul.f32 %v203, %v488
        %v509 = vmul.f32 %v204, %v492
        %v510 = vmul.f32 %v205, %v492
        %v511 = vmul.f32 %v206, %v496
        %v512 = vmul.f32 %v207, %v496
        %513 = vst [vmem:[%s189] sm:$0xff] %v497
        %514 = vst [vmem:[%s189 + $0x8] sm:$0xff] %v498
        %515 = vst [vmem:[%s189 + $0x10] sm:$0xff] %v499
        %516 = vst [vmem:[%s189 + $0x18] sm:$0xff] %v500
        %517 = vst [vmem:[%s189 + $0x20] sm:$0xff] %v501
        %518 = vst [vmem:[%s189 + $0x28] sm:$0xff] %v502
        %519 = vst [vmem:[%s189 + $0x30] sm:$0xff] %v503
        %520 = vst [vmem:[%s189 + $0x38] sm:$0xff] %v504
        %521 = vst [vmem:[%s189 + $0x40] sm:$0xff] %v505
        %522 = vst [vmem:[%s189 + $0x48] sm:$0xff] %v506
        %523 = vst [vmem:[%s189 + $0x50] sm:$0xff] %v507
        %524 = vst [vmem:[%s189 + $0x58] sm:$0xff] %v508
        %525 = vst [vmem:[%s189 + $0x60] sm:$0xff] %v509
        %526 = vst [vmem:[%s189 + $0x68] sm:$0xff] %v510
        %527 = vst [vmem:[%s189 + $0x70] sm:$0xff] %v511
        %528 = vst [vmem:[%s189 + $0x78] sm:$0xff] %v512
        %s529 = sand.u32 %s96, 1
        %s530 = scalar_lea.sflag [#allocation4], %s529
        %s531 = sand.u32 %s96, 1
        %s532 = smul.addr %s531, 128
        %s533 = scalar_lea.vmem [#allocation5], %s532
        // Predicated region
        $region37: #{tpu_custom_call.1} parent=31 // pred_check
          %p534 = pneg %p106
        $region38: #{tpu_custom_call.1} parent=31 // pred_check_branch
          %536 = sbr.rel (%p534) target = $region40
        $region39: #{tpu_custom_call.1} parent=31 // pred_region
          %s537 = smul.u32 2, %s20
          %s539 = ssub.s32 2048, 2048
          %540 = vsyncadd %s530, %s539
          %s541 = smul.addr %s537, 8
          %s542 = smul.addr %s541, 128
          %s543 = scalar_lea.hbm %s3, %s542
          %s544 = sshll.u32 %s533, 4
          %s545 = int_to_ptr.vmem [resolvable:$true] %s544
          %550 = dma.vmem_to_hbm [thread:$0]  %s545, 2048, %s543, %s530, 256, 256, 16
        $region40: #{tpu_custom_call.1} parent=31 // pred_fallthru
          _
      $region32: #{tpu_custom_call.1} parent=5 // pred_fallthru
        _
      %p551 = scmp.le.s32.totalorder 2, %s15
      // Predicated region
      $region41: #{tpu_custom_call.1} parent=5 // pred_check
        %p552 = pneg %p551
      $region42: #{tpu_custom_call.1} parent=5 // pred_check_branch
        %554 = sbr.rel (%p552) target = $region44
      $region43: #{tpu_custom_call.1} parent=5 // pred_region
        %s555 = ssub.s32 %s15, 2
        // Predicated region
        $region45: #{tpu_custom_call.1} parent=43 // pred_check
          %p556 = pneg %p112
        $region46: #{tpu_custom_call.1} parent=43 // pred_check_branch
          %558 = sbr.rel (%p556) target = $region48
        $region47: #{tpu_custom_call.1} parent=43 // pred_region
          %s559 = sand.u32 %s97, 1
          %s560 = scalar_lea.sflag [#allocation4], %s559
          %s561 = sand.u32 %s97, 1
          %s562 = smul.addr %s561, 128
          %s563 = scalar_lea.vmem [#allocation5], %s562
          %564 = dma.done %s560, 2048
        $region48: #{tpu_custom_call.1} parent=43 // pred_fallthru
          _
      $region44: #{tpu_custom_call.1} parent=5 // pred_fallthru
        _
    $region6: #{tpu_custom_call.1} parent=1 // loop_footer
      %s19 = sadd.s32 1, %s15
    $region7: #{tpu_custom_call.1} parent=1 // loop_footer_branch
      %14 = sbr.rel target = $region3
    $region8: #{tpu_custom_call.1} parent=1 // loop_exit
      _
    %565 = vsyncpa [#allocation3], 1
    %s566 = scalar_lea.sflag [#allocation3], 1
    %567 = vsyncpa %s566, 1
    %568 = vsyncpa [#allocation4], 1
    %s569 = scalar_lea.sflag [#allocation4], 1
    %570 = vsyncpa %s569, 1

</llo_original>
